<compile_context>
chip_gen: v5e
topology: v5e:2x2
jax: 0.10.0
libtpu: 0.0.40
codegen_flags: <defaults>
</compile_context>

<pallas_src>
import functools

import jax
import jax.numpy as jnp
import numpy as np
from jax import lax
from jax.experimental import pallas as pl
from jax.experimental.pallas import tpu as pltpu

_EPS = 1e-5
_LANES = 128
_TARGET_ROWS = 2048   # rows (B_tile*L) per grid step: fills MXU-M, amortizes step overhead


def _round_up(x, m):
    return (x + m - 1) // m * m


def _vmem_limit_bytes():
    """Generation-aware scoped-VMEM limit: v5e/v6e (128 MiB physical) -> 64 MiB,
    v7x (64 MiB physical) -> 32 MiB.  Safe 32 MiB fallback."""
    try:
        cap = int(pltpu.get_tpu_info().vmem_capacity_bytes)
    except Exception:
        return 32 * 1024 * 1024
    return max(16 * 1024 * 1024, min(cap // 2, 64 * 1024 * 1024))


def _pick_batch_tile(n, l):
    """Largest divisor of n giving ~_TARGET_ROWS rows per grid step."""
    bt = max(1, min(n, _TARGET_ROWS // max(l, 1)))
    while n % bt:
        bt -= 1
    return bt


# ---------------------------------------------------------------------------
# In-kernel helpers
# ---------------------------------------------------------------------------
def _conv3_taps(x3, w_ref):
    """3-tap 'same' Conv1d over the L axis of one (B_tile, L, K) f32 tile.

    w_ref: (3, K, Cout_p) bf16; tap 0 multiplies x[l-1], tap 1 x[l], tap 2 x[l+1].
    Halo taps are shifted per sample with a zero row (no cross-sample leakage when
    several batch elements share one grid step).  Returns (B_tile*L, Cout_p) f32.
    """
    b, l, k = x3.shape
    rows = b * l
    zero_row = jnp.zeros((b, 1, k), x3.dtype)
    x_m1 = jnp.concatenate([zero_row, x3[:, :l - 1, :]], axis=1)   # x[l-1]
    x_p1 = jnp.concatenate([x3[:, 1:, :], zero_row], axis=1)       # x[l+1]
    acc = jnp.dot(x_m1.astype(jnp.bfloat16).reshape(rows, k), w_ref[0],
                  preferred_element_type=jnp.float32)
    acc = acc + jnp.dot(x3.astype(jnp.bfloat16).reshape(rows, k), w_ref[1],
                        preferred_element_type=jnp.float32)
    acc = acc + jnp.dot(x_p1.astype(jnp.bfloat16).reshape(rows, k), w_ref[2],
                        preferred_element_type=jnp.float32)
    return acc


def _partial_stats(y):
    """Per-channel {sum, sum_sq} of this grid step's f32 tile (chunked accumulation;
    the per-step partials are summed in the wrapper)."""
    return jnp.concatenate([jnp.sum(y, axis=0, keepdims=True),
                            jnp.sum(y * y, axis=0, keepdims=True)], axis=0)


# ---------------------------------------------------------------------------
# Pass kernels (grid over batch; every pass is fully 'parallel')
# ---------------------------------------------------------------------------
def _conv1_stats_kernel(x_ref, w1_ref, y1_ref, s1_ref):
    b, l, _ = x_ref.shape
    y = _conv3_taps(x_ref[...].astype(jnp.float32), w1_ref)   # (rows, Cmid_p) f32
    s1_ref[...] = _partial_stats(y)
    y1_ref[...] = y.astype(jnp.bfloat16).reshape(b, l, y.shape[1])


def _bn1_relu_conv2_stats_kernel(y1_ref, sb1_ref, w2_ref, y2_ref, s2_ref):
    b, l, cm = y1_ref.shape
    scale = sb1_ref[0:1, :].reshape(1, 1, cm)
    shift = sb1_ref[1:2, :].reshape(1, 1, cm)
    h = jnp.maximum(y1_ref[...].astype(jnp.float32) * scale + shift, 0.0)
    y = _conv3_taps(h, w2_ref)                                 # (rows, Cout_p) f32
    s2_ref[...] = _partial_stats(y)
    y2_ref[...] = y.astype(jnp.bfloat16).reshape(b, l, y.shape[1])


def _bn2_relu_kernel(y2_ref, sb2_ref, o_ref, *, cout):
    _, _, cp = y2_ref.shape
    scale = sb2_ref[0:1, :].reshape(1, 1, cp)
    shift = sb2_ref[1:2, :].reshape(1, 1, cp)
    out = jnp.maximum(y2_ref[...].astype(jnp.float32) * scale + shift, 0.0)
    o_ref[...] = out if cout == cp else out[:, :, :cout]       # unpadded direct store


# ---------------------------------------------------------------------------
# Wrapper-side helpers (tiny XLA ops between passes)
# ---------------------------------------------------------------------------
def _fold_bn(stats, gamma, beta, count, c_p):
    """Fold training-mode BatchNorm1d into one per-channel scale/shift.

    stats: (G, 2, C_p) per-step partial {sum, sum_sq}; mean / biased variance over the
    FULL (N, L) batch, eps=1e-5.  Padded channels get scale=shift=0.
    """
    s = jnp.sum(stats, axis=0)
    mean = s[0] / count
    var = jnp.maximum(s[1] / count - mean * mean, 0.0)
    g = jnp.pad(gamma.astype(jnp.float32), (0, c_p - gamma.shape[0]))
    b = jnp.pad(beta.astype(jnp.float32), (0, c_p - beta.shape[0]))
    scale = g * lax.rsqrt(var + _EPS)
    shift = b - mean * scale
    return jnp.stack([scale, shift])            # (2, C_p) f32


def _conv_taps(w_pt, k_pad, cout_p):
    """PyTorch Conv1d weight (Cout, Cin, 3) -> (3, Cin + k_pad, Cout_p) bf16 taps."""
    cout, cin, _ = w_pt.shape
    w = jnp.transpose(w_pt, (2, 1, 0)).astype(jnp.float32)     # (3, Cin, Cout)
    w = jnp.pad(w, ((0, 0), (0, k_pad), (0, cout_p - cout)))
    return w.astype(jnp.bfloat16)


# ---------------------------------------------------------------------------
# Forward
# ---------------------------------------------------------------------------
def double_conv_nlc(x_nlc, params):
    """DoubleConv forward, channels-last: (N, L, Cin) float -> (N, L, Cout) float32.

    Training-mode BatchNorm1d semantics.  Conv biases are dropped: the batch-mean
    subtraction of training-mode BN cancels any constant per-channel offset exactly.
    """
    (w1, _b1, g1, bt1, w2, _b2, g2, bt2) = params
    n, l, cin = x_nlc.shape
    cmid, cout = w1.shape[0], w2.shape[0]
    cmid_p = _round_up(cmid, _LANES)
    cout_p = _round_up(cout, _LANES)

    bt = _pick_batch_tile(n, l)
    grid = (n // bt,)
    count = float(n * l)
    cparams = pltpu.CompilerParams(
        dimension_semantics=("parallel",),          # per-step partial stats -> no accumulator
        vmem_limit_bytes=_vmem_limit_bytes())

    w1_t = _conv_taps(w1, 0, cmid_p)                # (3, Cin,    Cmid_p) — raw Cin contraction
    w2_t = _conv_taps(w2, cmid_p - cmid, cout_p)    # (3, Cmid_p, Cout_p)

    def act(c):
        return pl.BlockSpec((bt, l, c), lambda g: (g, 0, 0))

    def resident(shape):
        zeros = (0,) * len(shape)
        return pl.BlockSpec(shape, lambda g: zeros)

    def stats(c):
        return pl.BlockSpec((None, 2, c), lambda g: (g, 0, 0))

    # Pass 1: conv1 -> bf16 y1 + per-step partial BN1 stats.
    y1, s1 = pl.pallas_call(
        _conv1_stats_kernel,
        grid=grid,
        in_specs=[act(cin), resident(w1_t.shape)],
        out_specs=(act(cmid_p), stats(cmid_p)),
        out_shape=(jax.ShapeDtypeStruct((n, l, cmid_p), jnp.bfloat16),
                   jax.ShapeDtypeStruct((grid[0], 2, cmid_p), jnp.float32)),
        compiler_params=cparams,
    )(x_nlc, w1_t)

    sb1 = _fold_bn(s1, g1, bt1, count, cmid_p)

    # Pass 2: BN1 (one FMA) + ReLU + conv2 -> bf16 y2 + partial BN2 stats.
    y2, s2 = pl.pallas_call(
        _bn1_relu_conv2_stats_kernel,
        grid=grid,
        in_specs=[act(cmid_p), resident((2, cmid_p)), resident(w2_t.shape)],
        out_specs=(act(cout_p), stats(cout_p)),
        out_shape=(jax.ShapeDtypeStruct((n, l, cout_p), jnp.bfloat16),
                   jax.ShapeDtypeStruct((grid[0], 2, cout_p), jnp.float32)),
        compiler_params=cparams,
    )(y1, sb1, w2_t)

    sb2 = _fold_bn(s2, g2, bt2, count, cout_p)

    # Pass 3: BN2 (one FMA) + ReLU, written directly at the unpadded Cout width.
    out = pl.pallas_call(
        functools.partial(_bn2_relu_kernel, cout=cout),
        grid=grid,
        in_specs=[act(cout_p), resident((2, cout_p))],
        out_specs=act(cout),
        out_shape=jax.ShapeDtypeStruct((n, l, cout), jnp.float32),
        compiler_params=cparams,
    )(y2, sb2)
    return out


def double_conv(x_ncl, params):
    """PyTorch-layout entry point: (N, C_in, L) -> (N, C_out, L).

    Prefer double_conv_nlc for channels-last callers: the two transposes here are
    full-tensor HBM round trips outside the pipelined kernels.
    """
    out_nlc = double_conv_nlc(jnp.transpose(x_ncl, (0, 2, 1)), params)
    return jnp.transpose(out_nlc, (0, 2, 1))


def init_params(key, in_channels, out_channels, mid_channels=None):
    """PyTorch-shaped parameters: Conv1d weight (Cout, Cin, 3) + bias (Cout,);
    BatchNorm1d weight/bias (C,) with default init."""
    if not mid_channels:
        mid_channels = out_channels
    k1, k2, k3, k4 = jax.random.split(key, 4)

    def conv_init(kw, kb, cin, cout):
        bound = 1.0 / float(np.sqrt(cin * 3.0))
        w = jax.random.uniform(kw, (cout, cin, 3), jnp.float32, -bound, bound)
        b = jax.random.uniform(kb, (cout,), jnp.float32, -bound, bound)
        return w, b

    w1, b1 = conv_init(k1, k2, in_channels, mid_channels)
    w2, b2 = conv_init(k3, k4, mid_channels, out_channels)
    g1 = jnp.ones((mid_channels,), jnp.float32)
    bt1 = jnp.zeros((mid_channels,), jnp.float32)
    g2 = jnp.ones((out_channels,), jnp.float32)
    bt2 = jnp.zeros((out_channels,), jnp.float32)
    return (w1, b1, g1, bt1, w2, b2, g2, bt2)


def _reference_double_conv_nlc(x_nlc, params):
    """Pure-JAX reference that mirrors the kernel's quantization points (bf16 MXU operands,
    f32 accumulation, bf16 inter-pass activations, f32 stats).  Conv biases are dropped
    here as well because training-mode BN cancels them exactly."""
    (w1, b1, g1, bt1, w2, b2, g2, bt2) = params
    del b1, b2

    def q(a):
        return a.astype(jnp.bfloat16).astype(jnp.float32)

    def conv_same(h, w):                      # h: (N, L, C), w: (Cout, Cin, 3)
        seq = h.shape[1]
        hpad = jnp.pad(h, ((0, 0), (1, 1), (0, 0)))
        return sum(jnp.einsum("nlc,oc->nlo", q(hpad[:, k:k + seq, :]), q(w[:, :, k]),
                              precision="highest") for k in range(3))

    def bn_relu(y, g, bt):
        mean = jnp.mean(y, axis=(0, 1))
        var = jnp.mean((y - mean) ** 2, axis=(0, 1))   # biased, training-mode BN
        scale = g * lax.rsqrt(var + _EPS)
        shift = bt - mean * scale
        return jnp.maximum(q(y) * scale + shift, 0.0)

    h = bn_relu(conv_same(x_nlc, w1), g1, bt1)
    return bn_relu(conv_same(h, w2), g2, bt2)


if __name__ == "__main__":
    N, CIN, COUT, L = 2, 4, 8, 16
    key = jax.random.PRNGKey(0)
    kx, kp = jax.random.split(key)

    x = jax.random.normal(kx, (N, CIN, L), jnp.float32)
    params = init_params(kp, CIN, COUT)

    out = jax.block_until_ready(jax.jit(double_conv)(x, params))
    assert out.shape == (N, COUT, L), out.shape
    assert bool(jnp.all(jnp.isfinite(out)))

    ref = jnp.transpose(
        _reference_double_conv_nlc(jnp.transpose(x, (0, 2, 1)), params), (0, 2, 1))
    np.testing.assert_allclose(np.asarray(out), np.asarray(ref), rtol=1e-2, atol=1e-2)
    print("KERNEL_OK")
</pallas_src>

<mosaic_0001>
module attributes {stable_mosaic.version = 11 : i64} {
  func.func @_conv1_stats_kernel(%arg0: i32, %arg1: memref<2x16x4xf32, #tpu.memory_space<vmem>>, %arg2: memref<3x4x128xbf16, #tpu.memory_space<vmem>>, %arg3: memref<2x16x128xbf16, #tpu.memory_space<vmem>>, %arg4: memref<1x2x128xf32, #tpu.memory_space<vmem>>) attributes {dimension_semantics = [#tpu.dimension_semantics<parallel>], iteration_bounds = array<i64: 1>, scalar_prefetch = 0 : i64, scratch_operands = 0 : i64, tpu.core_type = #tpu.core_type<tc>, window_params = [{transform_indices = @transform_0, window_bounds = array<i64: 2, 16, 4>}, {pipeline_mode = #tpu.pipeline_mode<synchronous>, transform_indices = @transform_1, window_bounds = array<i64: 3, 4, 128>}, {transform_indices = @transform_2, window_bounds = array<i64: 2, 16, 128>}, {transform_indices = @transform_3, window_bounds = array<i64: 1, 2, 128>}]} {
    %c0 = arith.constant 0 : index
    %c0_0 = arith.constant 0 : index
    %c0_1 = arith.constant 0 : index
    %0 = vector.load %arg1[%c0, %c0_0, %c0_1] : memref<2x16x4xf32, #tpu.memory_space<vmem>>, vector<2x16x4xf32>
    %cst = arith.constant 0.000000e+00 : f32
    %1 = vector.broadcast %cst : f32 to vector<2x1x4xf32>
    %2 = vector.extract_strided_slice %0 {offsets = [0, 0, 0], sizes = [2, 15, 4], strides = [1, 1, 1]} : vector<2x16x4xf32> to vector<2x15x4xf32>
    %3 = tpu.concatenate %1, %2 in 1 : vector<2x1x4xf32>, vector<2x15x4xf32> -> vector<2x16x4xf32>
    %4 = vector.extract_strided_slice %0 {offsets = [0, 1, 0], sizes = [2, 15, 4], strides = [1, 1, 1]} : vector<2x16x4xf32> to vector<2x15x4xf32>
    %5 = tpu.concatenate %4, %1 in 1 : vector<2x15x4xf32>, vector<2x1x4xf32> -> vector<2x16x4xf32>
    %6 = arith.truncf %3 : vector<2x16x4xf32> to vector<2x16x4xbf16>
    %7 = vector.shape_cast %6 : vector<2x16x4xbf16> to vector<32x4xbf16>
    %c0_2 = arith.constant 0 : index
    %c0_3 = arith.constant 0 : index
    %c0_4 = arith.constant 0 : index
    %8 = vector.load %arg2[%c0_2, %c0_3, %c0_4] : memref<3x4x128xbf16, #tpu.memory_space<vmem>>, vector<1x4x128xbf16>
    %9 = vector.shape_cast %8 : vector<1x4x128xbf16> to vector<4x128xbf16>
    %cst_5 = arith.constant dense<0.000000e+00> : vector<32x128xf32>
    %10 = tpu.matmul %7, %9, %cst_5 {dimension_numbers = #tpu.dot_dimension_numbers<[1], [0], [0], [1], [0, 0, 1, 1], [], []>} : vector<32x4xbf16>, vector<4x128xbf16>, vector<32x128xf32> -> vector<32x128xf32>
    %11 = arith.truncf %0 : vector<2x16x4xf32> to vector<2x16x4xbf16>
    %12 = vector.shape_cast %11 : vector<2x16x4xbf16> to vector<32x4xbf16>
    %c1 = arith.constant 1 : index
    %c0_6 = arith.constant 0 : index
    %c0_7 = arith.constant 0 : index
    %13 = vector.load %arg2[%c1, %c0_6, %c0_7] : memref<3x4x128xbf16, #tpu.memory_space<vmem>>, vector<1x4x128xbf16>
    %14 = vector.shape_cast %13 : vector<1x4x128xbf16> to vector<4x128xbf16>
    %cst_8 = arith.constant dense<0.000000e+00> : vector<32x128xf32>
    %15 = tpu.matmul %12, %14, %cst_8 {dimension_numbers = #tpu.dot_dimension_numbers<[1], [0], [0], [1], [0, 0, 1, 1], [], []>} : vector<32x4xbf16>, vector<4x128xbf16>, vector<32x128xf32> -> vector<32x128xf32>
    %16 = arith.addf %10, %15 : vector<32x128xf32>
    %17 = arith.truncf %5 : vector<2x16x4xf32> to vector<2x16x4xbf16>
    %18 = vector.shape_cast %17 : vector<2x16x4xbf16> to vector<32x4xbf16>
    %c2 = arith.constant 2 : index
    %c0_9 = arith.constant 0 : index
    %c0_10 = arith.constant 0 : index
    %19 = vector.load %arg2[%c2, %c0_9, %c0_10] : memref<3x4x128xbf16, #tpu.memory_space<vmem>>, vector<1x4x128xbf16>
    %20 = vector.shape_cast %19 : vector<1x4x128xbf16> to vector<4x128xbf16>
    %cst_11 = arith.constant dense<0.000000e+00> : vector<32x128xf32>
    %21 = tpu.matmul %18, %20, %cst_11 {dimension_numbers = #tpu.dot_dimension_numbers<[1], [0], [0], [1], [0, 0, 1, 1], [], []>} : vector<32x4xbf16>, vector<4x128xbf16>, vector<32x128xf32> -> vector<32x128xf32>
    %22 = arith.addf %16, %21 : vector<32x128xf32>
    %cst_12 = arith.constant dense<0.000000e+00> : vector<128xf32>
    %23 = vector.multi_reduction <add>, %22, %cst_12 [0] : vector<32x128xf32> to vector<128xf32>
    %24 = vector.shape_cast %23 : vector<128xf32> to vector<1x128xf32>
    %25 = arith.mulf %22, %22 : vector<32x128xf32>
    %cst_13 = arith.constant dense<0.000000e+00> : vector<128xf32>
    %26 = vector.multi_reduction <add>, %25, %cst_13 [0] : vector<32x128xf32> to vector<128xf32>
    %27 = vector.shape_cast %26 : vector<128xf32> to vector<1x128xf32>
    %28 = tpu.concatenate %24, %27 in 0 : vector<1x128xf32>, vector<1x128xf32> -> vector<2x128xf32>
    %c0_14 = arith.constant 0 : index
    %c0_15 = arith.constant 0 : index
    %c0_16 = arith.constant 0 : index
    %29 = vector.load %arg4[%c0_14, %c0_15, %c0_16] : memref<1x2x128xf32, #tpu.memory_space<vmem>>, vector<1x2x128xf32>
    %30 = vector.shape_cast %29 : vector<1x2x128xf32> to vector<2x128xf32>
    %31 = vector.shape_cast %28 : vector<2x128xf32> to vector<1x2x128xf32>
    tpu.vector_store %arg4[%c0_14, %c0_15, %c0_16], %31 {strides = array<i32>} : memref<1x2x128xf32, #tpu.memory_space<vmem>>, vector<1x2x128xf32>,
    %32 = arith.truncf %22 : vector<32x128xf32> to vector<32x128xbf16>
    %33 = vector.shape_cast %32 : vector<32x128xbf16> to vector<2x16x128xbf16>
    %c0_17 = arith.constant 0 : index
    %c0_18 = arith.constant 0 : index
    %c0_19 = arith.constant 0 : index
    %34 = vector.load %arg3[%c0_17, %c0_18, %c0_19] : memref<2x16x128xbf16, #tpu.memory_space<vmem>>, vector<2x16x128xbf16>
    tpu.vector_store %arg3[%c0_17, %c0_18, %c0_19], %33 {strides = array<i32>} : memref<2x16x128xbf16, #tpu.memory_space<vmem>>, vector<2x16x128xbf16>,
    return
  }
  func.func @transform_0(%arg0: i32) -> (i32, i32, i32) {
    %c0_i32 = arith.constant 0 : i32
    %c0_i32_0 = arith.constant 0 : i32
    %c0_i32_1 = arith.constant 0 : i32
    return %arg0, %c0_i32, %c0_i32_0 : i32, i32, i32
  }
  func.func @transform_1(%arg0: i32) -> (i32, i32, i32) {
    %c0_i32 = arith.constant 0 : i32
    %c0_i32_0 = arith.constant 0 : i32
    %c0_i32_1 = arith.constant 0 : i32
    %c0_i32_2 = arith.constant 0 : i32
    return %c0_i32, %c0_i32_0, %c0_i32_1 : i32, i32, i32
  }
  func.func @transform_2(%arg0: i32) -> (i32, i32, i32) {
    %c0_i32 = arith.constant 0 : i32
    %c0_i32_0 = arith.constant 0 : i32
    %c0_i32_1 = arith.constant 0 : i32
    return %arg0, %c0_i32, %c0_i32_0 : i32, i32, i32
  }
  func.func @transform_3(%arg0: i32) -> (i32, i32, i32) {
    %c0_i32 = arith.constant 0 : i32
    %c0_i32_0 = arith.constant 0 : i32
    %c0_i32_1 = arith.constant 0 : i32
    return %arg0, %c0_i32, %c0_i32_0 : i32, i32, i32
  }
}

module attributes {stable_mosaic.version = 11 : i64} {
  func.func @_bn2_relu_kernel(%arg0: i32, %arg1: memref<2x16x128xbf16, #tpu.memory_space<vmem>>, %arg2: memref<2x128xf32, #tpu.memory_space<vmem>>, %arg3: memref<2x16x8xf32, #tpu.memory_space<vmem>>) attributes {dimension_semantics = [#tpu.dimension_semantics<parallel>], iteration_bounds = array<i64: 1>, scalar_prefetch = 0 : i64, scratch_operands = 0 : i64, tpu.core_type = #tpu.core_type<tc>, window_params = [{transform_indices = @transform_0, window_bounds = array<i64: 2, 16, 128>}, {pipeline_mode = #tpu.pipeline_mode<synchronous>, transform_indices = @transform_1, window_bounds = array<i64: 2, 128>}, {transform_indices = @transform_2, window_bounds = array<i64: 2, 16, 8>}]} {
    %c0 = arith.constant 0 : index
    %c0_0 = arith.constant 0 : index
    %0 = vector.load %arg2[%c0, %c0_0] : memref<2x128xf32, #tpu.memory_space<vmem>>, vector<1x128xf32>
    %1 = vector.shape_cast %0 : vector<1x128xf32> to vector<1x1x128xf32>
    %c1 = arith.constant 1 : index
    %c0_1 = arith.constant 0 : index
    %2 = vector.load %arg2[%c1, %c0_1] : memref<2x128xf32, #tpu.memory_space<vmem>>, vector<1x128xf32>
    %3 = vector.shape_cast %2 : vector<1x128xf32> to vector<1x1x128xf32>
    %c0_2 = arith.constant 0 : index
    %c0_3 = arith.constant 0 : index
    %c0_4 = arith.constant 0 : index
    %4 = vector.load %arg1[%c0_2, %c0_3, %c0_4] : memref<2x16x128xbf16, #tpu.memory_space<vmem>>, vector<2x16x128xbf16>
    %5 = arith.extf %4 : vector<2x16x128xbf16> to vector<2x16x128xf32>
    %6 = vector.broadcast %1 : vector<1x1x128xf32> to vector<2x16x128xf32>
    %7 = arith.mulf %5, %6 : vector<2x16x128xf32>
    %8 = vector.broadcast %3 : vector<1x1x128xf32> to vector<2x16x128xf32>
    %9 = arith.addf %7, %8 : vector<2x16x128xf32>
    %cst = arith.constant 0.000000e+00 : f32
    %10 = vector.broadcast %cst : f32 to vector<2x16x128xf32>
    %11 = arith.maximumf %9, %10 : vector<2x16x128xf32>
    %12 = vector.extract_strided_slice %11 {offsets = [0, 0, 0], sizes = [2, 16, 8], strides = [1, 1, 1]} : vector<2x16x128xf32> to vector<2x16x8xf32>
    %c0_5 = arith.constant 0 : index
    %c0_6 = arith.constant 0 : index
    %c0_7 = arith.constant 0 : index
    %13 = vector.load %arg3[%c0_5, %c0_6, %c0_7] : memref<2x16x8xf32, #tpu.memory_space<vmem>>, vector<2x16x8xf32>
    tpu.vector_store %arg3[%c0_5, %c0_6, %c0_7], %12 {strides = array<i32>} : memref<2x16x8xf32, #tpu.memory_space<vmem>>, vector<2x16x8xf32>,
    return
  }
  func.func @transform_0(%arg0: i32) -> (i32, i32, i32) {
    %c0_i32 = arith.constant 0 : i32
    %c0_i32_0 = arith.constant 0 : i32
    %c0_i32_1 = arith.constant 0 : i32
    return %arg0, %c0_i32, %c0_i32_0 : i32, i32, i32
  }
  func.func @transform_1(%arg0: i32) -> (i32, i32) {
    %c0_i32 = arith.constant 0 : i32
    %c0_i32_0 = arith.constant 0 : i32
    %c0_i32_1 = arith.constant 0 : i32
    return %c0_i32, %c0_i32_0 : i32, i32
  }
  func.func @transform_2(%arg0: i32) -> (i32, i32, i32) {
    %c0_i32 = arith.constant 0 : i32
    %c0_i32_0 = arith.constant 0 : i32
    %c0_i32_1 = arith.constant 0 : i32
    return %arg0, %c0_i32, %c0_i32_0 : i32, i32, i32
  }
}

module attributes {stable_mosaic.version = 11 : i64} {
  func.func @_bn1_relu_conv2_stats_kernel(%arg0: i32, %arg1: memref<2x16x128xbf16, #tpu.memory_space<vmem>>, %arg2: memref<2x128xf32, #tpu.memory_space<vmem>>, %arg3: memref<3x128x128xbf16, #tpu.memory_space<vmem>>, %arg4: memref<2x16x128xbf16, #tpu.memory_space<vmem>>, %arg5: memref<1x2x128xf32, #tpu.memory_space<vmem>>) attributes {dimension_semantics = [#tpu.dimension_semantics<parallel>], iteration_bounds = array<i64: 1>, scalar_prefetch = 0 : i64, scratch_operands = 0 : i64, tpu.core_type = #tpu.core_type<tc>, window_params = [{transform_indices = @transform_0, window_bounds = array<i64: 2, 16, 128>}, {pipeline_mode = #tpu.pipeline_mode<synchronous>, transform_indices = @transform_1, window_bounds = array<i64: 2, 128>}, {pipeline_mode = #tpu.pipeline_mode<synchronous>, transform_indices = @transform_2, window_bounds = array<i64: 3, 128, 128>}, {transform_indices = @transform_3, window_bounds = array<i64: 2, 16, 128>}, {transform_indices = @transform_4, window_bounds = array<i64: 1, 2, 128>}]} {
    %c0 = arith.constant 0 : index
    %c0_0 = arith.constant 0 : index
    %0 = vector.load %arg2[%c0, %c0_0] : memref<2x128xf32, #tpu.memory_space<vmem>>, vector<1x128xf32>
    %1 = vector.shape_cast %0 : vector<1x128xf32> to vector<1x1x128xf32>
    %c1 = arith.constant 1 : index
    %c0_1 = arith.constant 0 : index
    %2 = vector.load %arg2[%c1, %c0_1] : memref<2x128xf32, #tpu.memory_space<vmem>>, vector<1x128xf32>
    %3 = vector.shape_cast %2 : vector<1x128xf32> to vector<1x1x128xf32>
    %c0_2 = arith.constant 0 : index
    %c0_3 = arith.constant 0 : index
    %c0_4 = arith.constant 0 : index
    %4 = vector.load %arg1[%c0_2, %c0_3, %c0_4] : memref<2x16x128xbf16, #tpu.memory_space<vmem>>, vector<2x16x128xbf16>
    %5 = arith.extf %4 : vector<2x16x128xbf16> to vector<2x16x128xf32>
    %6 = vector.broadcast %1 : vector<1x1x128xf32> to vector<2x16x128xf32>
    %7 = arith.mulf %5, %6 : vector<2x16x128xf32>
    %8 = vector.broadcast %3 : vector<1x1x128xf32> to vector<2x16x128xf32>
    %9 = arith.addf %7, %8 : vector<2x16x128xf32>
    %cst = arith.constant 0.000000e+00 : f32
    %10 = vector.broadcast %cst : f32 to vector<2x16x128xf32>
    %11 = arith.maximumf %9, %10 : vector<2x16x128xf32>
    %cst_5 = arith.constant 0.000000e+00 : f32
    %12 = vector.broadcast %cst_5 : f32 to vector<2x1x128xf32>
    %13 = vector.extract_strided_slice %11 {offsets = [0, 0, 0], sizes = [2, 15, 128], strides = [1, 1, 1]} : vector<2x16x128xf32> to vector<2x15x128xf32>
    %14 = tpu.concatenate %12, %13 in 1 : vector<2x1x128xf32>, vector<2x15x128xf32> -> vector<2x16x128xf32>
    %15 = vector.extract_strided_slice %11 {offsets = [0, 1, 0], sizes = [2, 15, 128], strides = [1, 1, 1]} : vector<2x16x128xf32> to vector<2x15x128xf32>
    %16 = tpu.concatenate %15, %12 in 1 : vector<2x15x128xf32>, vector<2x1x128xf32> -> vector<2x16x128xf32>
    %17 = arith.truncf %14 : vector<2x16x128xf32> to vector<2x16x128xbf16>
    %18 = vector.shape_cast %17 : vector<2x16x128xbf16> to vector<32x128xbf16>
    %c0_6 = arith.constant 0 : index
    %c0_7 = arith.constant 0 : index
    %c0_8 = arith.constant 0 : index
    %19 = vector.load %arg3[%c0_6, %c0_7, %c0_8] : memref<3x128x128xbf16, #tpu.memory_space<vmem>>, vector<1x128x128xbf16>
    %20 = vector.shape_cast %19 : vector<1x128x128xbf16> to vector<128x128xbf16>
    %cst_9 = arith.constant dense<0.000000e+00> : vector<32x128xf32>
    %21 = tpu.matmul %18, %20, %cst_9 {dimension_numbers = #tpu.dot_dimension_numbers<[1], [0], [0], [1], [0, 0, 1, 1], [], []>} : vector<32x128xbf16>, vector<128x128xbf16>, vector<32x128xf32> -> vector<32x128xf32>
    %22 = arith.truncf %11 : vector<2x16x128xf32> to vector<2x16x128xbf16>
    %23 = vector.shape_cast %22 : vector<2x16x128xbf16> to vector<32x128xbf16>
    %c1_10 = arith.constant 1 : index
    %c0_11 = arith.constant 0 : index
    %c0_12 = arith.constant 0 : index
    %24 = vector.load %arg3[%c1_10, %c0_11, %c0_12] : memref<3x128x128xbf16, #tpu.memory_space<vmem>>, vector<1x128x128xbf16>
    %25 = vector.shape_cast %24 : vector<1x128x128xbf16> to vector<128x128xbf16>
    %cst_13 = arith.constant dense<0.000000e+00> : vector<32x128xf32>
    %26 = tpu.matmul %23, %25, %cst_13 {dimension_numbers = #tpu.dot_dimension_numbers<[1], [0], [0], [1], [0, 0, 1, 1], [], []>} : vector<32x128xbf16>, vector<128x128xbf16>, vector<32x128xf32> -> vector<32x128xf32>
    %27 = arith.addf %21, %26 : vector<32x128xf32>
    %28 = arith.truncf %16 : vector<2x16x128xf32> to vector<2x16x128xbf16>
    %29 = vector.shape_cast %28 : vector<2x16x128xbf16> to vector<32x128xbf16>
    %c2 = arith.constant 2 : index
    %c0_14 = arith.constant 0 : index
    %c0_15 = arith.constant 0 : index
    %30 = vector.load %arg3[%c2, %c0_14, %c0_15] : memref<3x128x128xbf16, #tpu.memory_space<vmem>>, vector<1x128x128xbf16>
    %31 = vector.shape_cast %30 : vector<1x128x128xbf16> to vector<128x128xbf16>
    %cst_16 = arith.constant dense<0.000000e+00> : vector<32x128xf32>
    %32 = tpu.matmul %29, %31, %cst_16 {dimension_numbers = #tpu.dot_dimension_numbers<[1], [0], [0], [1], [0, 0, 1, 1], [], []>} : vector<32x128xbf16>, vector<128x128xbf16>, vector<32x128xf32> -> vector<32x128xf32>
    %33 = arith.addf %27, %32 : vector<32x128xf32>
    %cst_17 = arith.constant dense<0.000000e+00> : vector<128xf32>
    %34 = vector.multi_reduction <add>, %33, %cst_17 [0] : vector<32x128xf32> to vector<128xf32>
    %35 = vector.shape_cast %34 : vector<128xf32> to vector<1x128xf32>
    %36 = arith.mulf %33, %33 : vector<32x128xf32>
    %cst_18 = arith.constant dense<0.000000e+00> : vector<128xf32>
    %37 = vector.multi_reduction <add>, %36, %cst_18 [0] : vector<32x128xf32> to vector<128xf32>
    %38 = vector.shape_cast %37 : vector<128xf32> to vector<1x128xf32>
    %39 = tpu.concatenate %35, %38 in 0 : vector<1x128xf32>, vector<1x128xf32> -> vector<2x128xf32>
    %c0_19 = arith.constant 0 : index
    %c0_20 = arith.constant 0 : index
    %c0_21 = arith.constant 0 : index
    %40 = vector.load %arg5[%c0_19, %c0_20, %c0_21] : memref<1x2x128xf32, #tpu.memory_space<vmem>>, vector<1x2x128xf32>
    %41 = vector.shape_cast %40 : vector<1x2x128xf32> to vector<2x128xf32>
    %42 = vector.shape_cast %39 : vector<2x128xf32> to vector<1x2x128xf32>
    tpu.vector_store %arg5[%c0_19, %c0_20, %c0_21], %42 {strides = array<i32>} : memref<1x2x128xf32, #tpu.memory_space<vmem>>, vector<1x2x128xf32>,
    %43 = arith.truncf %33 : vector<32x128xf32> to vector<32x128xbf16>
    %44 = vector.shape_cast %43 : vector<32x128xbf16> to vector<2x16x128xbf16>
    %c0_22 = arith.constant 0 : index
    %c0_23 = arith.constant 0 : index
    %c0_24 = arith.constant 0 : index
    %45 = vector.load %arg4[%c0_22, %c0_23, %c0_24] : memref<2x16x128xbf16, #tpu.memory_space<vmem>>, vector<2x16x128xbf16>
    tpu.vector_store %arg4[%c0_22, %c0_23, %c0_24], %44 {strides = array<i32>} : memref<2x16x128xbf16, #tpu.memory_space<vmem>>, vector<2x16x128xbf16>,
    return
  }
  func.func @transform_0(%arg0: i32) -> (i32, i32, i32) {
    %c0_i32 = arith.constant 0 : i32
    %c0_i32_0 = arith.constant 0 : i32
    %c0_i32_1 = arith.constant 0 : i32
    return %arg0, %c0_i32, %c0_i32_0 : i32, i32, i32
  }
  func.func @transform_1(%arg0: i32) -> (i32, i32) {
    %c0_i32 = arith.constant 0 : i32
    %c0_i32_0 = arith.constant 0 : i32
    %c0_i32_1 = arith.constant 0 : i32
    return %c0_i32, %c0_i32_0 : i32, i32
  }
  func.func @transform_2(%arg0: i32) -> (i32, i32, i32) {
    %c0_i32 = arith.constant 0 : i32
    %c0_i32_0 = arith.constant 0 : i32
    %c0_i32_1 = arith.constant 0 : i32
    %c0_i32_2 = arith.constant 0 : i32
    return %c0_i32, %c0_i32_0, %c0_i32_1 : i32, i32, i32
  }
  func.func @transform_3(%arg0: i32) -> (i32, i32, i32) {
    %c0_i32 = arith.constant 0 : i32
    %c0_i32_0 = arith.constant 0 : i32
    %c0_i32_1 = arith.constant 0 : i32
    return %arg0, %c0_i32, %c0_i32_0 : i32, i32, i32
  }
  func.func @transform_4(%arg0: i32) -> (i32, i32, i32) {
    %c0_i32 = arith.constant 0 : i32
    %c0_i32_0 = arith.constant 0 : i32
    %c0_i32_1 = arith.constant 0 : i32
    return %arg0, %c0_i32, %c0_i32_0 : i32, i32, i32
  }
}

</mosaic_0001>

<llo_original>
// kernel: double_conv.5
$region0: #{double_conv.5}
  #allocation0 [shape = 'u32[]', space=smem, size = 0x4, offset = 0x4, fixed_abs, tag = 'smem constant byte address 0x4 - core index']
  #allocation1 [shape = 'u32[72,128]{1,0:T(1,128)}', space=vmem, size = 0x9000, scoped, tag = 'internal scratch']
  %s0 = inlined_call_operand.vmem [shape: bf16[2,16,128], index: 0, kind: input, shape index: {}]
  %s1 = inlined_call_operand.vmem [shape: f32[2,128], index: 1, kind: input, shape index: {}]
  %s2 = inlined_call_operand.vmem [shape: f32[2,16,8], index: 2, kind: output, shape index: {}]
  %s3 = sld [smem:[#allocation0]]
  $region18: #{double_conv.5} parent=0
    _
  %s5 = ssub.s32 1, %s3
  %s6 = scalar_select 0, %s5, %s3
  // Predicated region
  $region2: #{double_conv.5} parent=0 // pred_check
    _
  $region3: #{double_conv.5} parent=0 // pred_check_branch
    %8 = sbr.rel (0) target = $region5
  $region4: #{double_conv.5} parent=0 // pred_region
    _
  $region5: #{double_conv.5} parent=0 // pred_fallthru
    _
  // Predicated region
  $region6: #{double_conv.5} parent=0 // pred_check
    _
  $region7: #{double_conv.5} parent=0 // pred_check_branch
    %10 = sbr.rel (0) target = $region9
  $region8: #{double_conv.5} parent=0 // pred_region
    _
  $region9: #{double_conv.5} parent=0 // pred_fallthru
    _
  %v11 = vld [vmem:[%s1] sm:$0x1]
  %v12 = vld [vmem:[%s1 + $0x1] sm:$0x1]
  %v13 = vld [vmem:[%s0] sm:$0xf]
  %v14 = vld [vmem:[%s0 + $0x4] sm:$0xf]
  %v15 = vld [vmem:[%s0 + $0x8] sm:$0xf]
  %v16 = vld [vmem:[%s0 + $0xc] sm:$0xf]
  %v17 = vunpack.c.l.bf16 %v13
  %v18 = vunpack.c.l.bf16 %v14
  %v19 = vunpack.c.l.bf16 %v15
  %v20 = vunpack.c.l.bf16 %v16
  %v21 = vperm.slane %v11, 0
  %v22 = vmul.f32 %v17, %v21
  %v23 = vmul.f32 %v18, %v21
  %v24 = vmul.f32 %v19, %v21
  %v25 = vmul.f32 %v20, %v21
  %v26 = vperm.slane %v12, 0
  %v27 = vadd.f32 %v22, %v26
  %v28 = vadd.f32 %v23, %v26
  %v29 = vadd.f32 %v24, %v26
  %v30 = vadd.f32 %v25, %v26
  %v31 = vmax.f32 %v27, 0.0
  %v32 = vmax.f32 %v28, 0.0
  %v33 = vmax.f32 %v29, 0.0
  %v34 = vmax.f32 %v30, 0.0
  %vm35 = vcmask 64512
  %36 = vst.msk [vmem:[%s2] sm:$0xff] %vm35, %v31
  %37 = vst.msk [vmem:[%s2 + $0x8] sm:$0xff] %vm35, %v32
  %38 = vst.msk [vmem:[%s2 + $0x10] sm:$0xff] %vm35, %v33
  %39 = vst.msk [vmem:[%s2 + $0x18] sm:$0xff] %vm35, %v34
  // Predicated region
  $region10: #{double_conv.5} parent=0 // pred_check
    _
  $region11: #{double_conv.5} parent=0 // pred_check_branch
    %41 = sbr.rel (0) target = $region13
  $region12: #{double_conv.5} parent=0 // pred_region
    _
  $region13: #{double_conv.5} parent=0 // pred_fallthru
    _
  // Predicated region
  $region14: #{double_conv.5} parent=0 // pred_check
    _
  $region15: #{double_conv.5} parent=0 // pred_check_branch
    %43 = sbr.rel (0) target = $region17
  $region16: #{double_conv.5} parent=0 // pred_region
    _
  $region17: #{double_conv.5} parent=0 // pred_fallthru
    _

// kernel: double_conv.3
$region0: #{double_conv.3}
  #allocation0 [shape = 'u32[]', space=smem, size = 0x4, offset = 0x4, fixed_abs, tag = 'smem constant byte address 0x4 - core index']
  #allocation1 [shape = 'u32[72,128]{1,0:T(1,128)}', space=vmem, size = 0x9000, scoped, tag = 'internal scratch']
  %s0 = inlined_call_operand.vmem [shape: f32[2,16,4], index: 0, kind: input, shape index: {}]
  %s1 = inlined_call_operand.vmem [shape: bf16[3,4,128], index: 1, kind: input, shape index: {}]
  %s2 = inlined_call_operand.vmem [shape: bf16[2,16,128], index: 2, kind: output, shape index: {0}]
  %s3 = inlined_call_operand.vmem [shape: f32[1,2,128], index: 3, kind: output, shape index: {1}]
  %4 = xla_tuple %s2, %s3
  %s5 = sld [smem:[#allocation0]]
  $region26: #{double_conv.3} parent=0
    _
  %s7 = ssub.s32 1, %s5
  %s8 = scalar_select 0, %s7, %s5
  // Predicated region
  $region2: #{double_conv.3} parent=0 // pred_check
    _
  $region3: #{double_conv.3} parent=0 // pred_check_branch
    %10 = sbr.rel (0) target = $region5
  $region4: #{double_conv.3} parent=0 // pred_region
    _
  $region5: #{double_conv.3} parent=0 // pred_fallthru
    _
  // Predicated region
  $region6: #{double_conv.3} parent=0 // pred_check
    _
  $region7: #{double_conv.3} parent=0 // pred_check_branch
    %12 = sbr.rel (0) target = $region9
  $region8: #{double_conv.3} parent=0 // pred_region
    _
  $region9: #{double_conv.3} parent=0 // pred_fallthru
    _
  %v14 = vld [vmem:[%s0] sm:$0xff]
  %v15 = vld [vmem:[%s0 + $0x8] sm:$0xff]
  %v16 = vld [vmem:[%s0 + $0x10] sm:$0xff]
  %v17 = vld [vmem:[%s0 + $0x18] sm:$0xff]
  %vm22 = vcmask 1040384
  %v23 = vrot.slane %v14, 7
  %v24 = vrot.slane %v15, 7
  %v25 = vsel %vm22, %v23, %v24
  %v26 = vrot.slane %v16, 7
  %v27 = vrot.slane %v17, 7
  %v28 = vsel %vm22, %v26, %v27
  %v33 = vsel %vm22, 0.0, %v23
  %v34 = vsel %vm22, 0.0, %v26
  %vm35 = vcmask 1046528
  %v36 = vrot.slane %v14, 1
  %v37 = vrot.slane %v15, 1
  %v38 = vsel %vm35, %v36, %v37
  %v39 = vrot.slane %v16, 1
  %v40 = vrot.slane %v17, 1
  %v41 = vsel %vm35, %v39, %v40
  %v46 = vsel %vm35, %v37, 0.0
  %v47 = vsel %vm35, %v40, 0.0
  %v48 = vpack.c.bf16 %v33, %v33
  %v49 = vpack.c.bf16 %v25, %v25
  %v50 = vpack.c.bf16 %v34, %v34
  %v51 = vpack.c.bf16 %v28, %v28
  %v52 = vld [vmem:[%s1] sm:$0x3]
  %v53 = vpack.c.bf16 %v14, %v14
  %v54 = vpack.c.bf16 %v15, %v15
  %v55 = vpack.c.bf16 %v16, %v16
  %v56 = vpack.c.bf16 %v17, %v17
  %s57 = scalar_lea.vmem %s1, 2
  %v58 = vld [vmem:[%s57] sm:$0x3]
  %v63 = vunpack.c.l.b16 %v53
  %v64 = vunpack.c.l.b16 %v54
  %v65 = vunpack.c.l.b16 %v55
  %v66 = vunpack.c.l.b16 %v56
  %v67 = vpack.c.b16 %v64, %v63
  %v68 = vpack.c.b16 %v66, %v65
  %vm69 = vcmask 31744
  %v71 = vsel %vm69, %v67, 0
  %v74 = vsel %vm69, %v68, 0
  %vm76 = vcmask 1041408
  %v78 = vsel %vm76, %v58, 0
  %80 = vmatpush.bf16.msra.mxu0 0
  %81 = vmatpush.bf16.msra.mxu0 0
  %82 = vmatpush.bf16.msra.mxu0 0
  %83 = vmatpush.bf16.msra.mxu0 0
  %84 = vmatpush.bf16.msra.mxu0 0
  %85 = vmatpush.bf16.msra.mxu0 0
  %86 = vmatpush.bf16.msra.mxu0 0
  %87 = vmatpush.bf16.msra.mxu0 %v78
  %88 = vmatmul.bf16.gmra.mxu0 %v71
  %v89 = vpop.f32.mrf.mxu0
  %v90 = vadd.f32 0.0, %v89
  %v91 = vpop.f32.mrf.mxu0
  %v92 = vadd.f32 0.0, %v91
  %93 = vmatmul.bf16.gmra.mxu0 %v74
  %v94 = vpop.f32.mrf.mxu0
  %v95 = vadd.f32 0.0, %v94
  %v96 = vpop.f32.mrf.mxu0
  %v97 = vadd.f32 0.0, %v96
  %98 = vdwg.mxu0
  %v103 = vunpack.c.l.b16 %v48
  %v104 = vunpack.c.l.b16 %v49
  %v105 = vunpack.c.l.b16 %v50
  %v106 = vunpack.c.l.b16 %v51
  %v107 = vpack.c.b16 %v104, %v103
  %v108 = vpack.c.b16 %v106, %v105
  %v110 = vsel %vm69, %v107, 0
  %v113 = vsel %vm69, %v108, 0
  %v116 = vsel %vm76, %v52, 0
  %118 = vmatpush.bf16.msra.mxu0 0
  %119 = vmatpush.bf16.msra.mxu0 0
  %120 = vmatpush.bf16.msra.mxu0 0
  %121 = vmatpush.bf16.msra.mxu0 0
  %122 = vmatpush.bf16.msra.mxu0 0
  %123 = vmatpush.bf16.msra.mxu0 0
  %124 = vmatpush.bf16.msra.mxu0 0
  %125 = vmatpush.bf16.msra.mxu0 %v116
  %126 = vmatmul.bf16.gmra.mxu0 %v110
  %v127 = vpop.f32.mrf.mxu0
  %v128 = vadd.f32 %v90, %v127
  %v129 = vpop.f32.mrf.mxu0
  %v130 = vadd.f32 %v92, %v129
  %131 = vmatmul.bf16.gmra.mxu0 %v113
  %v132 = vpop.f32.mrf.mxu0
  %v133 = vadd.f32 %v95, %v132
  %v134 = vpop.f32.mrf.mxu0
  %v135 = vadd.f32 %v97, %v134
  %136 = vdwg.mxu0
  %v137 = vpack.c.bf16 %v38, %v38
  %v138 = vpack.c.bf16 %v46, %v46
  %v139 = vpack.c.bf16 %v41, %v41
  %v140 = vpack.c.bf16 %v47, %v47
  %s141 = scalar_lea.vmem %s1, 4
  %v142 = vld [vmem:[%s141] sm:$0x3]
  %v147 = vunpack.c.l.b16 %v137
  %v148 = vunpack.c.l.b16 %v138
  %v149 = vunpack.c.l.b16 %v139
  %v150 = vunpack.c.l.b16 %v140
  %v151 = vpack.c.b16 %v148, %v147
  %v152 = vpack.c.b16 %v150, %v149
  %v154 = vsel %vm69, %v151, 0
  %v157 = vsel %vm69, %v152, 0
  %v160 = vsel %vm76, %v142, 0
  %162 = vmatpush.bf16.msra.mxu0 0
  %163 = vmatpush.bf16.msra.mxu0 0
  %164 = vmatpush.bf16.msra.mxu0 0
  %165 = vmatpush.bf16.msra.mxu0 0
  %166 = vmatpush.bf16.msra.mxu0 0
  %167 = vmatpush.bf16.msra.mxu0 0
  %168 = vmatpush.bf16.msra.mxu0 0
  %169 = vmatpush.bf16.msra.mxu0 %v160
  %170 = vmatmul.bf16.gmra.mxu0 %v154
  %v171 = vpop.f32.mrf.mxu0
  %v172 = vadd.f32 0.0, %v171
  %v173 = vpop.f32.mrf.mxu0
  %v174 = vadd.f32 0.0, %v173
  %175 = vmatmul.bf16.gmra.mxu0 %v157
  %v176 = vpop.f32.mrf.mxu0
  %v177 = vadd.f32 0.0, %v176
  %v178 = vpop.f32.mrf.mxu0
  %v179 = vadd.f32 0.0, %v178
  %180 = vdwg.mxu0
  %v181 = vadd.f32 %v128, %v172
  %v182 = vadd.f32 %v130, %v174
  %v183 = vadd.f32 %v133, %v177
  %v184 = vadd.f32 %v135, %v179
  %v185 = vadd.f32 %v181, %v182
  %v186 = vadd.f32 %v185, %v183
  %v187 = vadd.f32 %v186, %v184
  %v188 = vrot.slane %v187, 4
  %v189 = vadd.f32 %v187, %v188
  %v190 = vrot.slane %v189, 2
  %v191 = vadd.f32 %v189, %v190
  %v192 = vrot.slane %v191, 1
  %v193 = vadd.f32 %v191, %v192
  %v194 = vmul.f32 %v181, %v181
  %v195 = vmul.f32 %v182, %v182
  %v196 = vmul.f32 %v183, %v183
  %v197 = vmul.f32 %v184, %v184
  %v198 = vadd.f32 %v194, %v195
  %v199 = vadd.f32 %v198, %v196
  %v200 = vadd.f32 %v199, %v197
  %v201 = vrot.slane %v200, 4
  %v202 = vadd.f32 %v200, %v201
  %v203 = vrot.slane %v202, 2
  %v204 = vadd.f32 %v202, %v203
  %v205 = vrot.slane %v204, 1
  %v206 = vadd.f32 %v204, %v205
  %v207 = vsel %vm22, %v193, %v206
  %208 = vst [vmem:[%s3] sm:$0x3] %v207
  %v209 = vpack.c.bf16 %v181, %v181
  %v210 = vpack.c.bf16 %v182, %v182
  %v211 = vpack.c.bf16 %v183, %v183
  %v212 = vpack.c.bf16 %v184, %v184
  %213 = vst [vmem:[%s2] sm:$0xf] %v209
  %214 = vst [vmem:[%s2 + $0x4] sm:$0xf] %v210
  %215 = vst [vmem:[%s2 + $0x8] sm:$0xf] %v211
  %216 = vst [vmem:[%s2 + $0xc] sm:$0xf] %v212
  // Predicated region
  $region10: #{double_conv.3} parent=0 // pred_check
    _
  $region11: #{double_conv.3} parent=0 // pred_check_branch
    %218 = sbr.rel (0) target = $region13
  $region12: #{double_conv.3} parent=0 // pred_region
    _
  $region13: #{double_conv.3} parent=0 // pred_fallthru
    _
  // Predicated region
  $region14: #{double_conv.3} parent=0 // pred_check
    _
  $region15: #{double_conv.3} parent=0 // pred_check_branch
    %220 = sbr.rel (0) target = $region17
  $region16: #{double_conv.3} parent=0 // pred_region
    _
  $region17: #{double_conv.3} parent=0 // pred_fallthru
    _
  // Predicated region
  $region18: #{double_conv.3} parent=0 // pred_check
    _
  $region19: #{double_conv.3} parent=0 // pred_check_branch
    %222 = sbr.rel (0) target = $region21
  $region20: #{double_conv.3} parent=0 // pred_region
    _
  $region21: #{double_conv.3} parent=0 // pred_fallthru
    _
  // Predicated region
  $region22: #{double_conv.3} parent=0 // pred_check
    _
  $region23: #{double_conv.3} parent=0 // pred_check_branch
    %224 = sbr.rel (0) target = $region25
  $region24: #{double_conv.3} parent=0 // pred_region
    _
  $region25: #{double_conv.3} parent=0 // pred_fallthru
    _

// kernel: double_conv.4
$region0: #{double_conv.4}
  #allocation0 [shape = 'u32[]', space=smem, size = 0x4, offset = 0x4, fixed_abs, tag = 'smem constant byte address 0x4 - core index']
  #allocation1 [shape = 'u32[72,128]{1,0:T(1,128)}', space=vmem, size = 0x9000, scoped, tag = 'internal scratch']
  %s0 = inlined_call_operand.vmem [shape: bf16[2,16,128], index: 0, kind: input, shape index: {}]
  %s1 = inlined_call_operand.vmem [shape: f32[2,128], index: 1, kind: input, shape index: {}]
  %s2 = inlined_call_operand.vmem [shape: bf16[3,128,128], index: 2, kind: input, shape index: {}]
  %s3 = inlined_call_operand.vmem [shape: bf16[2,16,128], index: 3, kind: output, shape index: {0}]
  %s4 = inlined_call_operand.vmem [shape: f32[1,2,128], index: 4, kind: output, shape index: {1}]
  %5 = xla_tuple %s3, %s4
  %s6 = sld [smem:[#allocation0]]
  $region30: #{double_conv.4} parent=0
    _
  %s8 = ssub.s32 1, %s6
  %s9 = scalar_select 0, %s8, %s6
  // Predicated region
  $region2: #{double_conv.4} parent=0 // pred_check
    _
  $region3: #{double_conv.4} parent=0 // pred_check_branch
    %11 = sbr.rel (0) target = $region5
  $region4: #{double_conv.4} parent=0 // pred_region
    _
  $region5: #{double_conv.4} parent=0 // pred_fallthru
    _
  // Predicated region
  $region6: #{double_conv.4} parent=0 // pred_check
    _
  $region7: #{double_conv.4} parent=0 // pred_check_branch
    %13 = sbr.rel (0) target = $region9
  $region8: #{double_conv.4} parent=0 // pred_region
    _
  $region9: #{double_conv.4} parent=0 // pred_fallthru
    _
  // Predicated region
  $region10: #{double_conv.4} parent=0 // pred_check
    _
  $region11: #{double_conv.4} parent=0 // pred_check_branch
    %15 = sbr.rel (0) target = $region13
  $region12: #{double_conv.4} parent=0 // pred_region
    _
  $region13: #{double_conv.4} parent=0 // pred_fallthru
    _
  %v16 = vld [vmem:[%s1] sm:$0x1]
  %v17 = vld [vmem:[%s1 + $0x1] sm:$0x1]
  %v18 = vld [vmem:[%s0] sm:$0xf]
  %v19 = vld [vmem:[%s0 + $0x4] sm:$0xf]
  %v20 = vld [vmem:[%s0 + $0x8] sm:$0xf]
  %v21 = vld [vmem:[%s0 + $0xc] sm:$0xf]
  %v22 = vunpack.c.l.bf16 %v18
  %v23 = vunpack.c.l.bf16 %v19
  %v24 = vunpack.c.l.bf16 %v20
  %v25 = vunpack.c.l.bf16 %v21
  %v26 = vperm.slane %v16, 0
  %v27 = vmul.f32 %v22, %v26
  %v28 = vmul.f32 %v23, %v26
  %v29 = vmul.f32 %v24, %v26
  %v30 = vmul.f32 %v25, %v26
  %v31 = vperm.slane %v17, 0
  %v32 = vadd.f32 %v27, %v31
  %v33 = vadd.f32 %v28, %v31
  %v34 = vadd.f32 %v29, %v31
  %v35 = vadd.f32 %v30, %v31
  %v36 = vmax.f32 %v32, 0.0
  %v37 = vmax.f32 %v33, 0.0
  %v38 = vmax.f32 %v34, 0.0
  %v39 = vmax.f32 %v35, 0.0
  %vm44 = vcmask 1040384
  %v45 = vrot.slane %v36, 7
  %v46 = vrot.slane %v37, 7
  %v47 = vsel %vm44, %v45, %v46
  %v48 = vrot.slane %v38, 7
  %v49 = vrot.slane %v39, 7
  %v50 = vsel %vm44, %v48, %v49
  %v55 = vsel %vm44, 0.0, %v45
  %v56 = vsel %vm44, 0.0, %v48
  %vm57 = vcmask 1046528
  %v58 = vrot.slane %v36, 1
  %v59 = vrot.slane %v37, 1
  %v60 = vsel %vm57, %v58, %v59
  %v61 = vrot.slane %v38, 1
  %v62 = vrot.slane %v39, 1
  %v63 = vsel %vm57, %v61, %v62
  %v68 = vsel %vm57, %v59, 0.0
  %v69 = vsel %vm57, %v62, 0.0
  %v70 = vpack.c.bf16 %v55, %v55
  %v71 = vpack.c.bf16 %v47, %v47
  %v72 = vpack.c.bf16 %v56, %v56
  %v73 = vpack.c.bf16 %v50, %v50
  %v74 = vld [vmem:[%s2] sm:$0xf]
  %v75 = vld [vmem:[%s2 + $0x4] sm:$0xf]
  %v76 = vld [vmem:[%s2 + $0x8] sm:$0xf]
  %v77 = vld [vmem:[%s2 + $0xc] sm:$0xf]
  %v78 = vld [vmem:[%s2 + $0x10] sm:$0xf]
  %v79 = vld [vmem:[%s2 + $0x14] sm:$0xf]
  %v80 = vld [vmem:[%s2 + $0x18] sm:$0xf]
  %v81 = vld [vmem:[%s2 + $0x1c] sm:$0xf]
  %v82 = vld [vmem:[%s2 + $0x20] sm:$0xf]
  %v83 = vld [vmem:[%s2 + $0x24] sm:$0xf]
  %v84 = vld [vmem:[%s2 + $0x28] sm:$0xf]
  %v85 = vld [vmem:[%s2 + $0x2c] sm:$0xf]
  %v86 = vld [vmem:[%s2 + $0x30] sm:$0xf]
  %v87 = vld [vmem:[%s2 + $0x34] sm:$0xf]
  %v88 = vld [vmem:[%s2 + $0x38] sm:$0xf]
  %v89 = vld [vmem:[%s2 + $0x3c] sm:$0xf]
  %v90 = vpack.c.bf16 %v36, %v36
  %v91 = vpack.c.bf16 %v37, %v37
  %v92 = vpack.c.bf16 %v38, %v38
  %v93 = vpack.c.bf16 %v39, %v39
  %s94 = scalar_lea.vmem %s2, 64
  %v95 = vld [vmem:[%s94] sm:$0xf]
  %v96 = vld [vmem:[%s94 + $0x4] sm:$0xf]
  %v97 = vld [vmem:[%s94 + $0x8] sm:$0xf]
  %v98 = vld [vmem:[%s94 + $0xc] sm:$0xf]
  %v99 = vld [vmem:[%s94 + $0x10] sm:$0xf]
  %v100 = vld [vmem:[%s94 + $0x14] sm:$0xf]
  %v101 = vld [vmem:[%s94 + $0x18] sm:$0xf]
  %v102 = vld [vmem:[%s94 + $0x1c] sm:$0xf]
  %v103 = vld [vmem:[%s94 + $0x20] sm:$0xf]
  %v104 = vld [vmem:[%s94 + $0x24] sm:$0xf]
  %v105 = vld [vmem:[%s94 + $0x28] sm:$0xf]
  %v106 = vld [vmem:[%s94 + $0x2c] sm:$0xf]
  %v107 = vld [vmem:[%s94 + $0x30] sm:$0xf]
  %v108 = vld [vmem:[%s94 + $0x34] sm:$0xf]
  %v109 = vld [vmem:[%s94 + $0x38] sm:$0xf]
  %v110 = vld [vmem:[%s94 + $0x3c] sm:$0xf]
  %v115 = vunpack.c.l.b16 %v90
  %v116 = vunpack.c.l.b16 %v91
  %v117 = vunpack.c.l.b16 %v92
  %v118 = vunpack.c.l.b16 %v93
  %v119 = vpack.c.b16 %v116, %v115
  %v120 = vpack.c.b16 %v118, %v117
  %v139 = vunpack.c.l.b16 %v95
  %v140 = vunpack.c.l.b16 %v96
  %v141 = vunpack.c.l.b16 %v97
  %v142 = vunpack.c.l.b16 %v98
  %v143 = vunpack.c.l.b16 %v99
  %v144 = vunpack.c.l.b16 %v100
  %v145 = vunpack.c.l.b16 %v101
  %v146 = vunpack.c.l.b16 %v102
  %v147 = vunpack.c.l.b16 %v103
  %v148 = vunpack.c.l.b16 %v104
  %v149 = vunpack.c.l.b16 %v105
  %v150 = vunpack.c.l.b16 %v106
  %v151 = vunpack.c.l.b16 %v107
  %v152 = vunpack.c.l.b16 %v108
  %v153 = vunpack.c.l.b16 %v109
  %v154 = vunpack.c.l.b16 %v110
  %v155 = vpack.c.b16 %v140, %v139
  %v156 = vpack.c.b16 %v142, %v141
  %v157 = vpack.c.b16 %v144, %v143
  %v158 = vpack.c.b16 %v146, %v145
  %v159 = vpack.c.b16 %v148, %v147
  %v160 = vpack.c.b16 %v150, %v149
  %v161 = vpack.c.b16 %v152, %v151
  %v162 = vpack.c.b16 %v154, %v153
  %171 = vmatpush.bf16.msra.mxu0 %v162
  %172 = vmatpush.bf16.msra.mxu0 %v161
  %173 = vmatpush.bf16.msra.mxu0 %v160
  %174 = vmatpush.bf16.msra.mxu0 %v159
  %175 = vmatpush.bf16.msra.mxu0 %v158
  %176 = vmatpush.bf16.msra.mxu0 %v157
  %177 = vmatpush.bf16.msra.mxu0 %v156
  %178 = vmatpush.bf16.msra.mxu0 %v155
  %179 = vmatmul.bf16.gmra.mxu0 %v119
  %v180 = vpop.f32.mrf.mxu0
  %v181 = vadd.f32 0.0, %v180
  %v182 = vpop.f32.mrf.mxu0
  %v183 = vadd.f32 0.0, %v182
  %184 = vmatmul.bf16.gmra.mxu0 %v120
  %v185 = vpop.f32.mrf.mxu0
  %v186 = vadd.f32 0.0, %v185
  %v187 = vpop.f32.mrf.mxu0
  %v188 = vadd.f32 0.0, %v187
  %189 = vdwg.mxu0
  %v194 = vunpack.c.l.b16 %v70
  %v195 = vunpack.c.l.b16 %v71
  %v196 = vunpack.c.l.b16 %v72
  %v197 = vunpack.c.l.b16 %v73
  %v198 = vpack.c.b16 %v195, %v194
  %v199 = vpack.c.b16 %v197, %v196
  %v218 = vunpack.c.l.b16 %v74
  %v219 = vunpack.c.l.b16 %v75
  %v220 = vunpack.c.l.b16 %v76
  %v221 = vunpack.c.l.b16 %v77
  %v222 = vunpack.c.l.b16 %v78
  %v223 = vunpack.c.l.b16 %v79
  %v224 = vunpack.c.l.b16 %v80
  %v225 = vunpack.c.l.b16 %v81
  %v226 = vunpack.c.l.b16 %v82
  %v227 = vunpack.c.l.b16 %v83
  %v228 = vunpack.c.l.b16 %v84
  %v229 = vunpack.c.l.b16 %v85
  %v230 = vunpack.c.l.b16 %v86
  %v231 = vunpack.c.l.b16 %v87
  %v232 = vunpack.c.l.b16 %v88
  %v233 = vunpack.c.l.b16 %v89
  %v234 = vpack.c.b16 %v219, %v218
  %v235 = vpack.c.b16 %v221, %v220
  %v236 = vpack.c.b16 %v223, %v222
  %v237 = vpack.c.b16 %v225, %v224
  %v238 = vpack.c.b16 %v227, %v226
  %v239 = vpack.c.b16 %v229, %v228
  %v240 = vpack.c.b16 %v231, %v230
  %v241 = vpack.c.b16 %v233, %v232
  %250 = vmatpush.bf16.msra.mxu0 %v241
  %251 = vmatpush.bf16.msra.mxu0 %v240
  %252 = vmatpush.bf16.msra.mxu0 %v239
  %253 = vmatpush.bf16.msra.mxu0 %v238
  %254 = vmatpush.bf16.msra.mxu0 %v237
  %255 = vmatpush.bf16.msra.mxu0 %v236
  %256 = vmatpush.bf16.msra.mxu0 %v235
  %257 = vmatpush.bf16.msra.mxu0 %v234
  %258 = vmatmul.bf16.gmra.mxu0 %v198
  %v259 = vpop.f32.mrf.mxu0
  %v260 = vadd.f32 %v181, %v259
  %v261 = vpop.f32.mrf.mxu0
  %v262 = vadd.f32 %v183, %v261
  %263 = vmatmul.bf16.gmra.mxu0 %v199
  %v264 = vpop.f32.mrf.mxu0
  %v265 = vadd.f32 %v186, %v264
  %v266 = vpop.f32.mrf.mxu0
  %v267 = vadd.f32 %v188, %v266
  %268 = vdwg.mxu0
  %v269 = vpack.c.bf16 %v60, %v60
  %v270 = vpack.c.bf16 %v68, %v68
  %v271 = vpack.c.bf16 %v63, %v63
  %v272 = vpack.c.bf16 %v69, %v69
  %s273 = scalar_lea.vmem %s2, 128
  %v274 = vld [vmem:[%s273] sm:$0xf]
  %v275 = vld [vmem:[%s273 + $0x4] sm:$0xf]
  %v276 = vld [vmem:[%s273 + $0x8] sm:$0xf]
  %v277 = vld [vmem:[%s273 + $0xc] sm:$0xf]
  %v278 = vld [vmem:[%s273 + $0x10] sm:$0xf]
  %v279 = vld [vmem:[%s273 + $0x14] sm:$0xf]
  %v280 = vld [vmem:[%s273 + $0x18] sm:$0xf]
  %v281 = vld [vmem:[%s273 + $0x1c] sm:$0xf]
  %v282 = vld [vmem:[%s273 + $0x20] sm:$0xf]
  %v283 = vld [vmem:[%s273 + $0x24] sm:$0xf]
  %v284 = vld [vmem:[%s273 + $0x28] sm:$0xf]
  %v285 = vld [vmem:[%s273 + $0x2c] sm:$0xf]
  %v286 = vld [vmem:[%s273 + $0x30] sm:$0xf]
  %v287 = vld [vmem:[%s273 + $0x34] sm:$0xf]
  %v288 = vld [vmem:[%s273 + $0x38] sm:$0xf]
  %v289 = vld [vmem:[%s273 + $0x3c] sm:$0xf]
  %v294 = vunpack.c.l.b16 %v269
  %v295 = vunpack.c.l.b16 %v270
  %v296 = vunpack.c.l.b16 %v271
  %v297 = vunpack.c.l.b16 %v272
  %v298 = vpack.c.b16 %v295, %v294
  %v299 = vpack.c.b16 %v297, %v296
  %v318 = vunpack.c.l.b16 %v274
  %v319 = vunpack.c.l.b16 %v275
  %v320 = vunpack.c.l.b16 %v276
  %v321 = vunpack.c.l.b16 %v277
  %v322 = vunpack.c.l.b16 %v278
  %v323 = vunpack.c.l.b16 %v279
  %v324 = vunpack.c.l.b16 %v280
  %v325 = vunpack.c.l.b16 %v281
  %v326 = vunpack.c.l.b16 %v282
  %v327 = vunpack.c.l.b16 %v283
  %v328 = vunpack.c.l.b16 %v284
  %v329 = vunpack.c.l.b16 %v285
  %v330 = vunpack.c.l.b16 %v286
  %v331 = vunpack.c.l.b16 %v287
  %v332 = vunpack.c.l.b16 %v288
  %v333 = vunpack.c.l.b16 %v289
  %v334 = vpack.c.b16 %v319, %v318
  %v335 = vpack.c.b16 %v321, %v320
  %v336 = vpack.c.b16 %v323, %v322
  %v337 = vpack.c.b16 %v325, %v324
  %v338 = vpack.c.b16 %v327, %v326
  %v339 = vpack.c.b16 %v329, %v328
  %v340 = vpack.c.b16 %v331, %v330
  %v341 = vpack.c.b16 %v333, %v332
  %350 = vmatpush.bf16.msra.mxu0 %v341
  %351 = vmatpush.bf16.msra.mxu0 %v340
  %352 = vmatpush.bf16.msra.mxu0 %v339
  %353 = vmatpush.bf16.msra.mxu0 %v338
  %354 = vmatpush.bf16.msra.mxu0 %v337
  %355 = vmatpush.bf16.msra.mxu0 %v336
  %356 = vmatpush.bf16.msra.mxu0 %v335
  %357 = vmatpush.bf16.msra.mxu0 %v334
  %358 = vmatmul.bf16.gmra.mxu0 %v298
  %v359 = vpop.f32.mrf.mxu0
  %v360 = vadd.f32 0.0, %v359
  %v361 = vpop.f32.mrf.mxu0
  %v362 = vadd.f32 0.0, %v361
  %363 = vmatmul.bf16.gmra.mxu0 %v299
  %v364 = vpop.f32.mrf.mxu0
  %v365 = vadd.f32 0.0, %v364
  %v366 = vpop.f32.mrf.mxu0
  %v367 = vadd.f32 0.0, %v366
  %368 = vdwg.mxu0
  %v369 = vadd.f32 %v260, %v360
  %v370 = vadd.f32 %v262, %v362
  %v371 = vadd.f32 %v265, %v365
  %v372 = vadd.f32 %v267, %v367
  %v373 = vadd.f32 %v369, %v370
  %v374 = vadd.f32 %v373, %v371
  %v375 = vadd.f32 %v374, %v372
  %v376 = vrot.slane %v375, 4
  %v377 = vadd.f32 %v375, %v376
  %v378 = vrot.slane %v377, 2
  %v379 = vadd.f32 %v377, %v378
  %v380 = vrot.slane %v379, 1
  %v381 = vadd.f32 %v379, %v380
  %v382 = vmul.f32 %v369, %v369
  %v383 = vmul.f32 %v370, %v370
  %v384 = vmul.f32 %v371, %v371
  %v385 = vmul.f32 %v372, %v372
  %v386 = vadd.f32 %v382, %v383
  %v387 = vadd.f32 %v386, %v384
  %v388 = vadd.f32 %v387, %v385
  %v389 = vrot.slane %v388, 4
  %v390 = vadd.f32 %v388, %v389
  %v391 = vrot.slane %v390, 2
  %v392 = vadd.f32 %v390, %v391
  %v393 = vrot.slane %v392, 1
  %v394 = vadd.f32 %v392, %v393
  %v395 = vsel %vm44, %v381, %v394
  %396 = vst [vmem:[%s4] sm:$0x3] %v395
  %v397 = vpack.c.bf16 %v369, %v369
  %v398 = vpack.c.bf16 %v370, %v370
  %v399 = vpack.c.bf16 %v371, %v371
  %v400 = vpack.c.bf16 %v372, %v372
  %401 = vst [vmem:[%s3] sm:$0xf] %v397
  %402 = vst [vmem:[%s3 + $0x4] sm:$0xf] %v398
  %403 = vst [vmem:[%s3 + $0x8] sm:$0xf] %v399
  %404 = vst [vmem:[%s3 + $0xc] sm:$0xf] %v400
  // Predicated region
  $region14: #{double_conv.4} parent=0 // pred_check
    _
  $region15: #{double_conv.4} parent=0 // pred_check_branch
    %406 = sbr.rel (0) target = $region17
  $region16: #{double_conv.4} parent=0 // pred_region
    _
  $region17: #{double_conv.4} parent=0 // pred_fallthru
    _
  // Predicated region
  $region18: #{double_conv.4} parent=0 // pred_check
    _
  $region19: #{double_conv.4} parent=0 // pred_check_branch
    %408 = sbr.rel (0) target = $region21
  $region20: #{double_conv.4} parent=0 // pred_region
    _
  $region21: #{double_conv.4} parent=0 // pred_fallthru
    _
  // Predicated region
  $region22: #{double_conv.4} parent=0 // pred_check
    _
  $region23: #{double_conv.4} parent=0 // pred_check_branch
    %410 = sbr.rel (0) target = $region25
  $region24: #{double_conv.4} parent=0 // pred_region
    _
  $region25: #{double_conv.4} parent=0 // pred_fallthru
    _
  // Predicated region
  $region26: #{double_conv.4} parent=0 // pred_check
    _
  $region27: #{double_conv.4} parent=0 // pred_check_branch
    %412 = sbr.rel (0) target = $region29
  $region28: #{double_conv.4} parent=0 // pred_region
    _
  $region29: #{double_conv.4} parent=0 // pred_fallthru
    _

</llo_original>
